<compile_context>
chip_gen: v5e
topology: v5e:2x2
jax: 0.10.0
libtpu: 0.0.40
codegen_flags: <defaults>
</compile_context>

<pallas_src>
import functools

import jax
import jax.numpy as jnp
import numpy as np
from jax import lax
from jax.experimental import pallas as pl
from jax.experimental.pallas import tpu as pltpu

INFINITY = 1000000000000.0


# --------------------------------------------------------------------------------------
# Stage 1: fused projection.  feat columns = [q | q_rot | k | k_rot | bias_start_end],
# with 1/sqrt(D) already folded into the q columns and RoPE rotation folded into *_rot.
# --------------------------------------------------------------------------------------
def _egp_proj_kernel(x_ref, w_ref, b_ref, cos_ref, sin_ref,
                     qw_ref, kw_ref, ball_ref, *, head_size):
    D = head_size
    x = x_ref[0]                                                        # (TS, H) bf16
    # single fused bf16 matmul (f32 accumulate), bias added in f32
    feat = jnp.dot(x, w_ref[...], preferred_element_type=jnp.float32) + b_ref[...]   # (TS, 4D+2*heads)

    cos = cos_ref[...]                                                  # (TS, D) f32
    sin = sin_ref[...]
    # TODO(synk): if production D is not a multiple of 128, pad each D-column group of W to 128 lanes so
    # these slices fall on vreg lane boundaries (free views instead of masked lane-selects).
    qw = feat[:, 0:D] * cos + feat[:, D:2 * D] * sin                    # scale already folded in
    kw = feat[:, 2 * D:3 * D] * cos + feat[:, 3 * D:4 * D] * sin

    qw_ref[0] = qw.astype(qw_ref.dtype)                                 # bf16 stage-2 MXU operands
    kw_ref[0] = kw.astype(kw_ref.dtype)
    ball_ref[0] = feat[:, 4 * D:]                                       # f32 bias [start-heads | end-heads]


# --------------------------------------------------------------------------------------
# Stage 2: tiled logits + epilogue.  One (heads, TM, TN) tile of the output per step.
# --------------------------------------------------------------------------------------
def _egp_logits_kernel(qw_ref, kw_ref, bs_ref, bet_ref, mrow_ref, mcol_ref, out_ref,
                       *, tm, tn, heads):
    f32 = jnp.float32
    mi = pl.program_id(1)
    ni = pl.program_id(2)

    # (TM, D) · (TN, D) contracted over D -> (TM, TN); bf16 operands, f32 accumulation on the MXU.
    logits = lax.dot_general(qw_ref[0], kw_ref[0], (((1,), (1,)), ((), ())),
                             preferred_element_type=f32)

    mr = mrow_ref[0]                    # (TM, 1) row mask
    mc = mcol_ref[0]                    # (1, TN) col mask
    keep = mr * mc

    # strict-lower-tril from a single broadcast compare; penalty collapsed to -INF*(1 - keep + tril)
    rid = mi * tm + lax.broadcasted_iota(jnp.int32, (tm, 1), 0)
    cid = ni * tn + lax.broadcasted_iota(jnp.int32, (1, tn), 1)
    tril = (rid > cid).astype(f32)                                      # (TM, TN)
    base = logits * keep + (-INFINITY) * (1.0 - keep + tril)            # shared across heads

    # TODO(synk): optionally pl.when-skip the dot for tiles fully below the diagonal once downstream
    # accepts "<= -1e12" instead of the exact masked value.
    bs = bs_ref[0]                      # (heads, TN) bias over columns n
    bet = bet_ref[0]                    # (TM, heads) bias over rows m
    for h in range(heads):              # per-head store keeps live temps small
        bias_h = bs[h:h + 1, :] + bet[:, h:h + 1]                       # (TM, TN)
        out_ref[0, h] = (base + bias_h * keep).astype(out_ref.dtype)


def efficient_global_pointer_pallas(x, mask, Wp, bp, Wq, bq, heads, head_size,
                                     *, tile=512, out_dtype=jnp.bfloat16):
    """x: (B, N, H); mask: (B, N) {0,1}; Wp: (2D, H); bp: (2D,); Wq: (2*heads, 2D); bq: (2*heads,)."""
    f32 = jnp.float32
    bf16 = jnp.bfloat16
    B, N, H = x.shape
    D = head_size
    half = D // 2

    xf = x.astype(f32)
    maskf = mask.astype(f32)

    # ---- tiling / padding ----
    if N <= tile:
        Npad, TM, TN = N, N, N
    else:
        Npad = ((N + tile - 1) // tile) * tile
        TM = TN = tile
    if Npad != N:
        xf = jnp.pad(xf, ((0, 0), (0, Npad - N), (0, 0)))
        maskf = jnp.pad(maskf, ((0, 0), (0, Npad - N)))
    x_bf = xf.astype(bf16)
    TS = TM                                # stage-1 row tile
    ns = Npad // TS

    # ---- host-side parameter folding ----
    Wp_t = Wp.T.astype(f32)                          # (H, 2D)
    Wpq, Wpk = Wp_t[:, 0::2], Wp_t[:, 1::2]          # (H, D) each (de-interleave q/k)
    bpq, bpk = bp.astype(f32)[0::2], bp.astype(f32)[1::2]

    # signed pair-swap permutation: rot(v)[2j] = -v[2j+1], rot(v)[2j+1] = v[2j]
    j = jnp.arange(half)
    R = jnp.zeros((D, D), f32).at[2 * j + 1, 2 * j].set(-1.0).at[2 * j, 2 * j + 1].set(1.0)
    scale = 1.0 / (D ** 0.5)

    # bias projection folded through p_dense: 0.5 * q_dense(p_dense(x)); columns [start heads | end heads]
    perm = jnp.concatenate([jnp.arange(0, 2 * heads, 2), jnp.arange(1, 2 * heads, 2)])
    WqT = Wq.T.astype(f32)[:, perm]                  # (2D, 2*heads)
    Wbias = 0.5 * (Wp_t @ WqT)                       # (H, 2*heads)
    bbias = 0.5 * (bp.astype(f32) @ WqT + bq.astype(f32)[perm])

    # one fused RHS: [Wq*s | (Wq*s)@R | Wk | Wk@R | Wbias]   (1/sqrt(D) folded into the q columns)
    W_all = jnp.concatenate([scale * Wpq, scale * (Wpq @ R), Wpk, Wpk @ R, Wbias], axis=1)  # (H, C)
    b_all = jnp.concatenate([scale * bpq, scale * (bpq @ R), bpk, bpk @ R, bbias]).reshape(1, -1)
    C = 4 * D + 2 * heads
    W_all_bf = W_all.astype(bf16)

    # single sinusoidal table pair (torch's pos[..., 1::2].repeat(1,1,2) layout)
    pos_n = jnp.arange(Npad, dtype=f32)
    theta = jnp.power(10000.0, -2.0 * jnp.arange(half, dtype=f32) / D)
    ang = pos_n[:, None] * theta[None, :]                                   # (Npad, D/2)
    cos_t = jnp.concatenate([jnp.cos(ang), jnp.cos(ang)], axis=-1)          # (Npad, D)
    sin_t = jnp.concatenate([jnp.sin(ang), jnp.sin(ang)], axis=-1)

    # ---- stage 1: fused per-row-tile projection ----
    qw, kw, ball = pl.pallas_call(
        functools.partial(_egp_proj_kernel, head_size=D),
        out_shape=(jax.ShapeDtypeStruct((B, Npad, D), bf16),
                   jax.ShapeDtypeStruct((B, Npad, D), bf16),
                   jax.ShapeDtypeStruct((B, Npad, 2 * heads), f32)),
        grid=(B, ns),
        in_specs=[pl.BlockSpec((1, TS, H), lambda b, i: (b, i, 0)),         # x (bf16)
                  pl.BlockSpec((H, C), lambda b, i: (0, 0)),                # fused weights (bf16)
                  pl.BlockSpec((1, C), lambda b, i: (0, 0)),                # fused bias (f32)
                  pl.BlockSpec((TS, D), lambda b, i: (i, 0)),               # cos
                  pl.BlockSpec((TS, D), lambda b, i: (i, 0))],              # sin
        out_specs=(pl.BlockSpec((1, TS, D), lambda b, i: (b, i, 0)),
                   pl.BlockSpec((1, TS, D), lambda b, i: (b, i, 0)),
                   pl.BlockSpec((1, TS, 2 * heads), lambda b, i: (b, i, 0))),
        compiler_params=pltpu.CompilerParams(
            dimension_semantics=("parallel", "parallel")),
        cost_estimate=pl.CostEstimate(
            flops=int(2 * B * Npad * H * C + 4 * B * Npad * D),
            transcendentals=0,
            bytes_accessed=int(2 * B * Npad * H + 2 * H * C + 4 * C + 8 * Npad * D
                               + 4 * B * Npad * D + 4 * B * Npad * 2 * heads)),
    )(x_bf, W_all_bf, b_all, cos_t, sin_t)

    # tiny wrapper-side layout plumbing (bias only — kw is consumed untransposed via dot_general)
    bias_s = jnp.swapaxes(ball[..., :heads], 1, 2)      # (B, heads, Npad): bias over columns n
    bias_e = ball[..., heads:]                          # (B, Npad, heads): bias over rows m
    mask_row = maskf.reshape(B, Npad, 1)
    mask_col = maskf.reshape(B, 1, Npad)

    # ---- stage 2: tiled logits + epilogue ----
    nm, nn = Npad // TM, Npad // TN
    out_itemsize = jnp.dtype(out_dtype).itemsize
    logits = pl.pallas_call(
        functools.partial(_egp_logits_kernel, tm=TM, tn=TN, heads=heads),
        out_shape=jax.ShapeDtypeStruct((B, heads, Npad, Npad), out_dtype),
        grid=(B, nm, nn),
        in_specs=[pl.BlockSpec((1, TM, D), lambda b, i, j: (b, i, 0)),      # qw row tile (bf16)
                  pl.BlockSpec((1, TN, D), lambda b, i, j: (b, j, 0)),      # kw col tile (bf16)
                  pl.BlockSpec((1, heads, TN), lambda b, i, j: (b, 0, j)),  # bias over n
                  pl.BlockSpec((1, TM, heads), lambda b, i, j: (b, i, 0)),  # bias over m
                  pl.BlockSpec((1, TM, 1), lambda b, i, j: (b, i, 0)),      # row mask
                  pl.BlockSpec((1, 1, TN), lambda b, i, j: (b, 0, j))],     # col mask
        out_specs=pl.BlockSpec((1, heads, TM, TN), lambda b, i, j: (b, 0, i, j)),
        compiler_params=pltpu.CompilerParams(
            dimension_semantics=("parallel", "parallel", "parallel"),
            vmem_limit_bytes=64 * 1024 * 1024),
        cost_estimate=pl.CostEstimate(
            flops=int(2 * B * Npad * Npad * D + 6 * B * heads * Npad * Npad),
            transcendentals=0,
            bytes_accessed=int(B * heads * Npad * Npad * out_itemsize
                               + 2 * B * Npad * D * 2 * max(nm, nn)
                               + 4 * B * Npad * (2 * heads + 2))),
    )(qw, kw, bias_s, bias_e, mask_row, mask_col)

    if Npad != N:
        logits = logits[:, :, :N, :N]
    return logits


def efficient_global_pointer_ref(x, mask, Wp, bp, Wq, bq, heads, head_size):
    """Pure-JAX mirror of the torch forward (for validation)."""
    hp = "highest"
    inputs = jnp.einsum("bnh,dh->bnd", x, Wp, precision=hp) + bp            # (B, N, 2D)
    qw, kw = inputs[..., 0::2], inputs[..., 1::2]
    B, N, _ = x.shape
    D = head_size
    pos_ids = jnp.arange(N, dtype=jnp.float32)
    theta = jnp.power(10000.0, -2.0 * jnp.arange(D // 2, dtype=jnp.float32) / D)
    emb = pos_ids[:, None] * theta[None, :]
    pos = jnp.stack([jnp.sin(emb), jnp.cos(emb)], axis=-1).reshape(1, N, D)
    cos_pos = jnp.tile(pos[..., 1::2], (1, 1, 2))
    sin_pos = jnp.tile(pos[..., 0::2], (1, 1, 2))
    qw2 = jnp.stack([-qw[..., 1::2], qw[..., 0::2]], axis=-1).reshape(qw.shape)
    kw2 = jnp.stack([-kw[..., 1::2], kw[..., 0::2]], axis=-1).reshape(kw.shape)
    qw_r = qw * cos_pos + qw2 * sin_pos
    kw_r = kw * cos_pos + kw2 * sin_pos
    logits = jnp.einsum("bmd,bnd->bmn", qw_r, kw_r, precision=hp) / D ** 0.5
    bias = jnp.einsum("bnh->bhn", jnp.einsum("bnd,hd->bnh", inputs, Wq, precision=hp) + bq) / 2
    logits = logits[:, None] + bias[:, 0::2, None] + bias[:, 1::2, :, None]
    m2 = mask[:, None, :, None]
    logits = logits * m2 + (-INFINITY) * (1 - m2)
    m3 = mask[:, None, None, :]
    logits = logits * m3 + (-INFINITY) * (1 - m3)
    tril = jnp.tril(jnp.ones((N, N), jnp.float32), k=-1)
    logits = logits - tril * INFINITY
    return logits


if __name__ == "__main__":
    B, N, H = 2, 8, 32
    heads, head_size = 4, 16

    key = jax.random.PRNGKey(0)
    k1, k2, k3, k4, k5 = jax.random.split(key, 5)
    x = jax.random.normal(k1, (B, N, H), jnp.float32)
    # torch nn.Linear param shapes: weight (out, in), bias (out,)
    Wp = jax.random.normal(k2, (2 * head_size, H), jnp.float32) * 0.1
    bp = jax.random.normal(k3, (2 * head_size,), jnp.float32) * 0.1
    Wq = jax.random.normal(k4, (2 * heads, 2 * head_size), jnp.float32) * 0.1
    bq = jax.random.normal(k5, (2 * heads,), jnp.float32) * 0.1
    mask = jnp.array([[1.0] * N, [1.0] * 6 + [0.0] * (N - 6)], jnp.float32)

    out = efficient_global_pointer_pallas(x, mask, Wp, bp, Wq, bq, heads, head_size)
    out = jax.block_until_ready(out)

    ref = efficient_global_pointer_ref(x, mask, Wp, bp, Wq, bq, heads, head_size)
    assert out.shape == (B, heads, N, N)
    # bf16 operands + bf16 output (per the perf review) => looser-than-f32 but still tight tolerance.
    out_f32 = np.asarray(out.astype(jnp.float32))
    np.testing.assert_allclose(out_f32, np.asarray(ref), rtol=5e-3, atol=1e-1)
    print("KERNEL_OK")
</pallas_src>

<mosaic_0001>
module attributes {stable_mosaic.version = 11 : i64} {
  func.func @_egp_proj_kernel(%arg0: i32, %arg1: i32, %arg2: memref<1x8x32xbf16, #tpu.memory_space<vmem>>, %arg3: memref<32x72xbf16, #tpu.memory_space<vmem>>, %arg4: memref<1x72xf32, #tpu.memory_space<vmem>>, %arg5: memref<8x16xf32, #tpu.memory_space<vmem>>, %arg6: memref<8x16xf32, #tpu.memory_space<vmem>>, %arg7: memref<1x8x16xbf16, #tpu.memory_space<vmem>>, %arg8: memref<1x8x16xbf16, #tpu.memory_space<vmem>>, %arg9: memref<1x8x8xf32, #tpu.memory_space<vmem>>) attributes {dimension_semantics = [#tpu.dimension_semantics<parallel>, #tpu.dimension_semantics<parallel>], iteration_bounds = array<i64: 2, 1>, scalar_prefetch = 0 : i64, scratch_operands = 0 : i64, tpu.core_type = #tpu.core_type<tc>, window_params = [{transform_indices = @transform_0, window_bounds = array<i64: 1, 8, 32>}, {pipeline_mode = #tpu.pipeline_mode<synchronous>, transform_indices = @transform_1, window_bounds = array<i64: 32, 72>}, {pipeline_mode = #tpu.pipeline_mode<synchronous>, transform_indices = @transform_2, window_bounds = array<i64: 1, 72>}, {transform_indices = @transform_3, window_bounds = array<i64: 8, 16>}, {transform_indices = @transform_4, window_bounds = array<i64: 8, 16>}, {transform_indices = @transform_5, window_bounds = array<i64: 1, 8, 16>}, {transform_indices = @transform_6, window_bounds = array<i64: 1, 8, 16>}, {transform_indices = @transform_7, window_bounds = array<i64: 1, 8, 8>}]} {
    %c0 = arith.constant 0 : index
    %c0_0 = arith.constant 0 : index
    %c0_1 = arith.constant 0 : index
    %0 = vector.load %arg2[%c0, %c0_0, %c0_1] : memref<1x8x32xbf16, #tpu.memory_space<vmem>>, vector<1x8x32xbf16>
    %1 = vector.shape_cast %0 : vector<1x8x32xbf16> to vector<8x32xbf16>
    %c0_2 = arith.constant 0 : index
    %c0_3 = arith.constant 0 : index
    %2 = vector.load %arg3[%c0_2, %c0_3] : memref<32x72xbf16, #tpu.memory_space<vmem>>, vector<32x72xbf16>
    %cst = arith.constant dense<0.000000e+00> : vector<8x72xf32>
    %3 = tpu.matmul %1, %2, %cst {dimension_numbers = #tpu.dot_dimension_numbers<[1], [0], [0], [1], [0, 0, 1, 1], [], []>} : vector<8x32xbf16>, vector<32x72xbf16>, vector<8x72xf32> -> vector<8x72xf32>
    %c0_4 = arith.constant 0 : index
    %c0_5 = arith.constant 0 : index
    %4 = vector.load %arg4[%c0_4, %c0_5] : memref<1x72xf32, #tpu.memory_space<vmem>>, vector<1x72xf32>
    %5 = vector.broadcast %4 : vector<1x72xf32> to vector<8x72xf32>
    %6 = arith.addf %3, %5 : vector<8x72xf32>
    %c0_6 = arith.constant 0 : index
    %c0_7 = arith.constant 0 : index
    %7 = vector.load %arg5[%c0_6, %c0_7] : memref<8x16xf32, #tpu.memory_space<vmem>>, vector<8x16xf32>
    %c0_8 = arith.constant 0 : index
    %c0_9 = arith.constant 0 : index
    %8 = vector.load %arg6[%c0_8, %c0_9] : memref<8x16xf32, #tpu.memory_space<vmem>>, vector<8x16xf32>
    %9 = vector.extract_strided_slice %6 {offsets = [0, 0], sizes = [8, 16], strides = [1, 1]} : vector<8x72xf32> to vector<8x16xf32>
    %10 = arith.mulf %9, %7 : vector<8x16xf32>
    %11 = vector.extract_strided_slice %6 {offsets = [0, 16], sizes = [8, 16], strides = [1, 1]} : vector<8x72xf32> to vector<8x16xf32>
    %12 = arith.mulf %11, %8 : vector<8x16xf32>
    %13 = arith.addf %10, %12 : vector<8x16xf32>
    %14 = vector.extract_strided_slice %6 {offsets = [0, 32], sizes = [8, 16], strides = [1, 1]} : vector<8x72xf32> to vector<8x16xf32>
    %15 = arith.mulf %14, %7 : vector<8x16xf32>
    %16 = vector.extract_strided_slice %6 {offsets = [0, 48], sizes = [8, 16], strides = [1, 1]} : vector<8x72xf32> to vector<8x16xf32>
    %17 = arith.mulf %16, %8 : vector<8x16xf32>
    %18 = arith.addf %15, %17 : vector<8x16xf32>
    %19 = arith.truncf %13 : vector<8x16xf32> to vector<8x16xbf16>
    %c0_10 = arith.constant 0 : index
    %c0_11 = arith.constant 0 : index
    %c0_12 = arith.constant 0 : index
    %20 = vector.load %arg7[%c0_10, %c0_11, %c0_12] : memref<1x8x16xbf16, #tpu.memory_space<vmem>>, vector<1x8x16xbf16>
    %21 = vector.shape_cast %20 : vector<1x8x16xbf16> to vector<8x16xbf16>
    %22 = vector.shape_cast %19 : vector<8x16xbf16> to vector<1x8x16xbf16>
    tpu.vector_store %arg7[%c0_10, %c0_11, %c0_12], %22 {strides = array<i32>} : memref<1x8x16xbf16, #tpu.memory_space<vmem>>, vector<1x8x16xbf16>,
    %23 = arith.truncf %18 : vector<8x16xf32> to vector<8x16xbf16>
    %c0_13 = arith.constant 0 : index
    %c0_14 = arith.constant 0 : index
    %c0_15 = arith.constant 0 : index
    %24 = vector.load %arg8[%c0_13, %c0_14, %c0_15] : memref<1x8x16xbf16, #tpu.memory_space<vmem>>, vector<1x8x16xbf16>
    %25 = vector.shape_cast %24 : vector<1x8x16xbf16> to vector<8x16xbf16>
    %26 = vector.shape_cast %23 : vector<8x16xbf16> to vector<1x8x16xbf16>
    tpu.vector_store %arg8[%c0_13, %c0_14, %c0_15], %26 {strides = array<i32>} : memref<1x8x16xbf16, #tpu.memory_space<vmem>>, vector<1x8x16xbf16>,
    %27 = vector.extract_strided_slice %6 {offsets = [0, 64], sizes = [8, 8], strides = [1, 1]} : vector<8x72xf32> to vector<8x8xf32>
    %c0_16 = arith.constant 0 : index
    %c0_17 = arith.constant 0 : index
    %c0_18 = arith.constant 0 : index
    %28 = vector.load %arg9[%c0_16, %c0_17, %c0_18] : memref<1x8x8xf32, #tpu.memory_space<vmem>>, vector<1x8x8xf32>
    %29 = vector.shape_cast %28 : vector<1x8x8xf32> to vector<8x8xf32>
    %30 = vector.shape_cast %27 : vector<8x8xf32> to vector<1x8x8xf32>
    tpu.vector_store %arg9[%c0_16, %c0_17, %c0_18], %30 {strides = array<i32>} : memref<1x8x8xf32, #tpu.memory_space<vmem>>, vector<1x8x8xf32>,
    return
  }
  func.func @transform_0(%arg0: i32, %arg1: i32) -> (i32, i32, i32) {
    %c0_i32 = arith.constant 0 : i32
    %c0_i32_0 = arith.constant 0 : i32
    return %arg0, %arg1, %c0_i32 : i32, i32, i32
  }
  func.func @transform_1(%arg0: i32, %arg1: i32) -> (i32, i32) {
    %c0_i32 = arith.constant 0 : i32
    %c0_i32_0 = arith.constant 0 : i32
    %c0_i32_1 = arith.constant 0 : i32
    return %c0_i32, %c0_i32_0 : i32, i32
  }
  func.func @transform_2(%arg0: i32, %arg1: i32) -> (i32, i32) {
    %c0_i32 = arith.constant 0 : i32
    %c0_i32_0 = arith.constant 0 : i32
    %c0_i32_1 = arith.constant 0 : i32
    return %c0_i32, %c0_i32_0 : i32, i32
  }
  func.func @transform_3(%arg0: i32, %arg1: i32) -> (i32, i32) {
    %c0_i32 = arith.constant 0 : i32
    %c0_i32_0 = arith.constant 0 : i32
    return %arg1, %c0_i32 : i32, i32
  }
  func.func @transform_4(%arg0: i32, %arg1: i32) -> (i32, i32) {
    %c0_i32 = arith.constant 0 : i32
    %c0_i32_0 = arith.constant 0 : i32
    return %arg1, %c0_i32 : i32, i32
  }
  func.func @transform_5(%arg0: i32, %arg1: i32) -> (i32, i32, i32) {
    %c0_i32 = arith.constant 0 : i32
    %c0_i32_0 = arith.constant 0 : i32
    return %arg0, %arg1, %c0_i32 : i32, i32, i32
  }
  func.func @transform_6(%arg0: i32, %arg1: i32) -> (i32, i32, i32) {
    %c0_i32 = arith.constant 0 : i32
    %c0_i32_0 = arith.constant 0 : i32
    return %arg0, %arg1, %c0_i32 : i32, i32, i32
  }
  func.func @transform_7(%arg0: i32, %arg1: i32) -> (i32, i32, i32) {
    %c0_i32 = arith.constant 0 : i32
    %c0_i32_0 = arith.constant 0 : i32
    return %arg0, %arg1, %c0_i32 : i32, i32, i32
  }
}

</mosaic_0001>

<llo_original>
// kernel: tpu_custom_call.1
$region0: #{tpu_custom_call.1}
  #allocation0 [shape = 'u32[]', space=smem, size = 0x4, offset = 0x4, fixed_abs, tag = 'smem constant byte address 0x4 - core index']
  #allocation1 [shape = 'u32[72,128]{1,0:T(1,128)}', space=vmem, size = 0x9000, scoped, tag = 'internal scratch']
  %s0 = inlined_call_operand.hbm [shape: bf16[2,8,32], index: 0, kind: input, shape index: {}]
  %s1 = inlined_call_operand.hbm [shape: bf16[32,72], index: 1, kind: input, shape index: {}]
  %s2 = inlined_call_operand.vmem [shape: f32[1,72], index: 2, kind: input, shape index: {}]
  %s3 = inlined_call_operand.hbm [shape: f32[8,16], index: 3, kind: input, shape index: {}]
  %s4 = inlined_call_operand.hbm [shape: f32[8,16], index: 4, kind: input, shape index: {}]
  %s5 = inlined_call_operand.hbm [shape: bf16[2,8,16], index: 5, kind: output, shape index: {0}]
  %s6 = inlined_call_operand.hbm [shape: bf16[2,8,16], index: 6, kind: output, shape index: {1}]
  %s7 = inlined_call_operand.hbm [shape: f32[2,8,8], index: 7, kind: output, shape index: {2}]
  %8 = xla_tuple %s5, %s6, %s7
  %s9 = sld [smem:[#allocation0]]
  $region85: #{tpu_custom_call.1} parent=0
    _
  %s11 = ssub.s32 1, %s9
  %s12 = scalar_select 0, %s11, %s9
  $region1: #{tpu_custom_call.1} parent=0
    #allocation2 [shape = 'u8[4096]{0}', space=vmem, size = 0x1000, scoped, tag = 'input window, operand 0']
    #allocation3 [shape = 's32[2]{0}', space=sflag, size = 0x8, scoped, tag = 'scoped memory for tpu_custom_call.1']
    #allocation4 [shape = 's32[2]{0}', space=sflag, size = 0x8, scoped, tag = 'scoped memory for tpu_custom_call.1']
    #allocation5 [shape = 'u8[8192]{0}', space=vmem, size = 0x2000, scoped, tag = 'input window, operand 1, single buffered']
    #allocation6 [shape = 's32[1]{0}', space=sflag, size = 0x4, scoped, tag = 'scoped memory for tpu_custom_call.1']
    #allocation7 [shape = 'u8[4096]{0}', space=vmem, size = 0x1000, scoped, tag = 'input window, operand 3, single buffered']
    #allocation8 [shape = 'u8[4096]{0}', space=vmem, size = 0x1000, scoped, tag = 'input window, operand 4, single buffered']
    #allocation9 [shape = 's32[1]{0}', space=sflag, size = 0x4, scoped, tag = 'scoped memory for tpu_custom_call.1']
    #allocation10 [shape = 'u8[4096]{0}', space=vmem, size = 0x1000, scoped, tag = 'output window, operand 0']
    #allocation11 [shape = 'u8[4096]{0}', space=vmem, size = 0x1000, scoped, tag = 'output window, operand 1']
    #allocation12 [shape = 's32[2]{0}', space=sflag, size = 0x8, scoped, tag = 'scoped memory for tpu_custom_call.1']
    #allocation13 [shape = 'u8[8192]{0}', space=vmem, size = 0x2000, scoped, tag = 'output window, operand 2']
    %13 = vsyncpa [#allocation3], 0
    %s14 = scalar_lea.sflag [#allocation3], 1
    %15 = vsyncpa %s14, 0
    %16 = vsyncpa [#allocation6], 0
    %17 = vsyncpa [#allocation9], 0
    %18 = vsyncpa [#allocation4], 0
    %s19 = scalar_lea.sflag [#allocation4], 1
    %20 = vsyncpa %s19, 0
    %21 = vsyncpa [#allocation12], 0
    %s22 = scalar_lea.sflag [#allocation12], 1
    %23 = vsyncpa %s22, 0
    loop: start=0, step=1, limit=4
    $region2: #{tpu_custom_call.1} parent=1 // loop_pre_header
      _
    $region3: #{tpu_custom_call.1} parent=1 // loop_header
      %s25 = sphi 0, %s29
      %p26 = scmp.ge.s32.totalorder %s25, 4
      %s32 = sphi 0, %s44
      %s33 = sphi 0, %s40
      %s34 = sphi 0, %s32
      %s35 = sphi 0, %s33
      %s36 = sphi 0, %s34
      %s37 = sphi 0, %s35
      %s49 = sphi 0, %s51
      %s52 = sphi 0, %s49
      %s53 = sphi 0, %s52
      %s69 = sphi 0, %s53
      %s73 = sphi 0, %s73
      %s75 = sphi 0, %s73
      %s76 = sphi 0, %s75
      %s90 = sphi 0, %s76
      %s94 = sphi 0, %s94
      %s96 = sphi 0, %s94
      %s97 = sphi 0, %s96
      %s111 = sphi 0, %s97
      %s117 = sphi 0, %s119
      %s120 = sphi 0, %s117
      %s121 = sphi 0, %s120
      %s137 = sphi 0, %s121
      %s143 = sphi 0, %s145
      %s146 = sphi 0, %s143
      %s147 = sphi 0, %s146
      %s163 = sphi 0, %s147
      %s171 = sphi 0, %s173
      %s174 = sphi 0, %s171
      %s175 = sphi 0, %s174
      %s191 = sphi 0, %s175
      %s199 = sphi 0, %s201
      %s202 = sphi 0, %s199
      %s203 = sphi 0, %s202
      %s219 = sphi 0, %s203
      %s227 = sphi 0, %s229
      %s230 = sphi 0, %s227
      %s231 = sphi 0, %s230
      %s247 = sphi 0, %s231
    $region4: #{tpu_custom_call.1} parent=1 // loop_header_branch
      %28 = sbr.rel (%p26) target = $region8
    $region5: #{tpu_custom_call.1} parent=1 // loop_body
      %s30 = ssub.s32 %s25, 1
      %s31 = ssub.s32 %s25, 2
      %s38 = sadd.s32 1, %s33
      %p39 = scmp.ge.s32.totalorder %s38, 1
      %s40 = scalar_select %p39, 0, %s38
      %s41 = sadd.s32 1, %s32
      %s42 = scalar_select %p39, %s41, %s32
      %p43 = scmp.ge.s32.totalorder %s42, 2
      %s44 = scalar_select %p43, 0, %s42
      %s45 = ssub.s32 %s32, %s44
      %s46 = ssub.s32 %s33, %s40
      %s47 = sor.u32 %s45, %s46
      %p48 = scmp.eq.s32.totalorder %s47, 0
      %s50 = sadd.s32 %s49, 1
      %s51 = scalar_select %p48, %s49, %s50
      %p54 = pneg %p48
      %p55 = scmp.eq.s32.totalorder %s25, 1
      %p56 = por %p54, %p55
      %p57 = scmp.ne.s32.totalorder %s49, %s52
      %p58 = scmp.eq.s32.totalorder %s25, 0
      %p59 = por %p57, %p58
      %p60 = scmp.ne.s32.totalorder %s49, %s52
      %p61 = scmp.eq.s32.totalorder %s30, 1
      %p62 = por %p60, %p61
      %p63 = scmp.ne.s32.totalorder %s52, %s53
      %p64 = scmp.eq.s32.totalorder %s30, 0
      %p65 = por %p63, %p64
      %p66 = scmp.ne.s32.totalorder %s52, %s53
      %p67 = scmp.eq.s32.totalorder %s31, 1
      %p68 = por %p66, %p67
      %p70 = scmp.ne.s32.totalorder %s53, %s69
      %p71 = scmp.eq.s32.totalorder %s31, 0
      %p72 = por %p70, %p71
      %s74 = sadd.s32 %s73, 1
      %p77 = scmp.eq.s32.totalorder %s25, 1
      %p78 = scmp.ne.s32.totalorder %s73, %s75
      %p79 = scmp.eq.s32.totalorder %s25, 0
      %p80 = por %p78, %p79
      %p81 = scmp.ne.s32.totalorder %s73, %s75
      %p82 = scmp.eq.s32.totalorder %s30, 1
      %p83 = por %p81, %p82
      %p84 = scmp.ne.s32.totalorder %s75, %s76
      %p85 = scmp.eq.s32.totalorder %s30, 0
      %p86 = por %p84, %p85
      %p87 = scmp.ne.s32.totalorder %s75, %s76
      %p88 = scmp.eq.s32.totalorder %s31, 1
      %p89 = por %p87, %p88
      %p91 = scmp.ne.s32.totalorder %s76, %s90
      %p92 = scmp.eq.s32.totalorder %s31, 0
      %p93 = por %p91, %p92
      %s95 = sadd.s32 %s94, 1
      %p98 = scmp.eq.s32.totalorder %s25, 1
      %p99 = scmp.ne.s32.totalorder %s94, %s96
      %p100 = scmp.eq.s32.totalorder %s25, 0
      %p101 = por %p99, %p100
      %p102 = scmp.ne.s32.totalorder %s94, %s96
      %p103 = scmp.eq.s32.totalorder %s30, 1
      %p104 = por %p102, %p103
      %p105 = scmp.ne.s32.totalorder %s96, %s97
      %p106 = scmp.eq.s32.totalorder %s30, 0
      %p107 = por %p105, %p106
      %p108 = scmp.ne.s32.totalorder %s96, %s97
      %p109 = scmp.eq.s32.totalorder %s31, 1
      %p110 = por %p108, %p109
      %p112 = scmp.ne.s32.totalorder %s97, %s111
      %p113 = scmp.eq.s32.totalorder %s31, 0
      %p114 = por %p112, %p113
      %s115 = ssub.s32 %s33, %s40
      %p116 = scmp.eq.s32.totalorder %s115, 0
      %s118 = sadd.s32 %s117, 1
      %s119 = scalar_select %p116, %s117, %s118
      %p122 = pneg %p116
      %p123 = scmp.eq.s32.totalorder %s25, 1
      %p124 = por %p122, %p123
      %p125 = scmp.ne.s32.totalorder %s117, %s120
      %p126 = scmp.eq.s32.totalorder %s25, 0
      %p127 = por %p125, %p126
      %p128 = scmp.ne.s32.totalorder %s117, %s120
      %p129 = scmp.eq.s32.totalorder %s30, 1
      %p130 = por %p128, %p129
      %p131 = scmp.ne.s32.totalorder %s120, %s121
      %p132 = scmp.eq.s32.totalorder %s30, 0
      %p133 = por %p131, %p132
      %p134 = scmp.ne.s32.totalorder %s120, %s121
      %p135 = scmp.eq.s32.totalorder %s31, 1
      %p136 = por %p134, %p135
      %p138 = scmp.ne.s32.totalorder %s121, %s137
      %p139 = scmp.eq.s32.totalorder %s31, 0
      %p140 = por %p138, %p139
      %s141 = ssub.s32 %s33, %s40
      %p142 = scmp.eq.s32.totalorder %s141, 0
      %s144 = sadd.s32 %s143, 1
      %s145 = scalar_select %p142, %s143, %s144
      %p148 = pneg %p142
      %p149 = scmp.eq.s32.totalorder %s25, 1
      %p150 = por %p148, %p149
      %p151 = scmp.ne.s32.totalorder %s143, %s146
      %p152 = scmp.eq.s32.totalorder %s25, 0
      %p153 = por %p151, %p152
      %p154 = scmp.ne.s32.totalorder %s143, %s146
      %p155 = scmp.eq.s32.totalorder %s30, 1
      %p156 = por %p154, %p155
      %p157 = scmp.ne.s32.totalorder %s146, %s147
      %p158 = scmp.eq.s32.totalorder %s30, 0
      %p159 = por %p157, %p158
      %p160 = scmp.ne.s32.totalorder %s146, %s147
      %p161 = scmp.eq.s32.totalorder %s31, 1
      %p162 = por %p160, %p161
      %p164 = scmp.ne.s32.totalorder %s147, %s163
      %p165 = scmp.eq.s32.totalorder %s31, 0
      %p166 = por %p164, %p165
      %s167 = ssub.s32 %s32, %s44
      %s168 = ssub.s32 %s33, %s40
      %s169 = sor.u32 %s167, %s168
      %p170 = scmp.eq.s32.totalorder %s169, 0
      %s172 = sadd.s32 %s171, 1
      %s173 = scalar_select %p170, %s171, %s172
      %p176 = pneg %p170
      %p177 = scmp.eq.s32.totalorder %s25, 1
      %p178 = por %p176, %p177
      %p179 = scmp.ne.s32.totalorder %s171, %s174
      %p180 = scmp.eq.s32.totalorder %s25, 0
      %p181 = por %p179, %p180
      %p182 = scmp.ne.s32.totalorder %s171, %s174
      %p183 = scmp.eq.s32.totalorder %s30, 1
      %p184 = por %p182, %p183
      %p185 = scmp.ne.s32.totalorder %s174, %s175
      %p186 = scmp.eq.s32.totalorder %s30, 0
      %p187 = por %p185, %p186
      %p188 = scmp.ne.s32.totalorder %s174, %s175
      %p189 = scmp.eq.s32.totalorder %s31, 1
      %p190 = por %p188, %p189
      %p192 = scmp.ne.s32.totalorder %s175, %s191
      %p193 = scmp.eq.s32.totalorder %s31, 0
      %p194 = por %p192, %p193
      %s195 = ssub.s32 %s32, %s44
      %s196 = ssub.s32 %s33, %s40
      %s197 = sor.u32 %s195, %s196
      %p198 = scmp.eq.s32.totalorder %s197, 0
      %s200 = sadd.s32 %s199, 1
      %s201 = scalar_select %p198, %s199, %s200
      %p204 = pneg %p198
      %p205 = scmp.eq.s32.totalorder %s25, 1
      %p206 = por %p204, %p205
      %p207 = scmp.ne.s32.totalorder %s199, %s202
      %p208 = scmp.eq.s32.totalorder %s25, 0
      %p209 = por %p207, %p208
      %p210 = scmp.ne.s32.totalorder %s199, %s202
      %p211 = scmp.eq.s32.totalorder %s30, 1
      %p212 = por %p210, %p211
      %p213 = scmp.ne.s32.totalorder %s202, %s203
      %p214 = scmp.eq.s32.totalorder %s30, 0
      %p215 = por %p213, %p214
      %p216 = scmp.ne.s32.totalorder %s202, %s203
      %p217 = scmp.eq.s32.totalorder %s31, 1
      %p218 = por %p216, %p217
      %p220 = scmp.ne.s32.totalorder %s203, %s219
      %p221 = scmp.eq.s32.totalorder %s31, 0
      %p222 = por %p220, %p221
      %s223 = ssub.s32 %s32, %s44
      %s224 = ssub.s32 %s33, %s40
      %s225 = sor.u32 %s223, %s224
      %p226 = scmp.eq.s32.totalorder %s225, 0
      %s228 = sadd.s32 %s227, 1
      %s229 = scalar_select %p226, %s227, %s228
      %p232 = pneg %p226
      %p233 = scmp.eq.s32.totalorder %s25, 1
      %p234 = por %p232, %p233
      %p235 = scmp.ne.s32.totalorder %s227, %s230
      %p236 = scmp.eq.s32.totalorder %s25, 0
      %p237 = por %p235, %p236
      %p238 = scmp.ne.s32.totalorder %s227, %s230
      %p239 = scmp.eq.s32.totalorder %s30, 1
      %p240 = por %p238, %p239
      %p241 = scmp.ne.s32.totalorder %s230, %s231
      %p242 = scmp.eq.s32.totalorder %s30, 0
      %p243 = por %p241, %p242
      %p244 = scmp.ne.s32.totalorder %s230, %s231
      %p245 = scmp.eq.s32.totalorder %s31, 1
      %p246 = por %p244, %p245
      %p248 = scmp.ne.s32.totalorder %s231, %s247
      %p249 = scmp.eq.s32.totalorder %s31, 0
      %p250 = por %p248, %p249
      %p251 = scmp.le.s32.totalorder 1, %s25
      %p252 = scmp.lt.s32.totalorder %s25, 3
      %p253 = pnand %p251, %p252
      %p254 = pneg %p253
      // Predicated region
      $region9: #{tpu_custom_call.1} parent=5 // pred_check
        _
      $region10: #{tpu_custom_call.1} parent=5 // pred_check_branch
        %256 = sbr.rel (%p253) target = $region12
      $region11: #{tpu_custom_call.1} parent=5 // pred_region
        %s257 = ssub.s32 %s25, 1
        // Predicated region
        $region13: #{tpu_custom_call.1} parent=11 // pred_check
          %p258 = pneg %p86
        $region14: #{tpu_custom_call.1} parent=11 // pred_check_branch
          %260 = sbr.rel (%p258) target = $region16
        $region15: #{tpu_custom_call.1} parent=11 // pred_region
          %262 = vsyncadd [#allocation6], 0
          %s263 = sshll.u32 %s1, 4
          %s264 = int_to_ptr.hbm [resolvable:$true] %s263
          %s265 = sshll.u32 [#allocation5], 4
          %s266 = int_to_ptr.vmem [resolvable:$true] %s265
          %271 = dma.hbm_to_vmem [thread:$0]  %s264, 256, %s266, [#allocation6], 64, 64, 4
        $region16: #{tpu_custom_call.1} parent=11 // pred_fallthru
          _
        // Predicated region
        $region17: #{tpu_custom_call.1} parent=11 // pred_check
          %p272 = pneg %p107
        $region18: #{tpu_custom_call.1} parent=11 // pred_check_branch
          %274 = sbr.rel (%p272) target = $region20
        $region19: #{tpu_custom_call.1} parent=11 // pred_region
          _
        $region20: #{tpu_custom_call.1} parent=11 // pred_fallthru
          _
        // Predicated region
        $region21: #{tpu_custom_call.1} parent=11 // pred_check
          %p275 = pneg %p133
        $region22: #{tpu_custom_call.1} parent=11 // pred_check_branch
          %277 = sbr.rel (%p275) target = $region24
        $region23: #{tpu_custom_call.1} parent=11 // pred_region
          %279 = vsyncadd [#allocation6], 0
          %s280 = smul.addr %s35, 8
          %s281 = scalar_lea.hbm %s3, %s280
          %s283 = sshll.u32 %s281, 4
          %s284 = int_to_ptr.hbm [resolvable:$true] %s283
          %s285 = sshll.u32 [#allocation7], 4
          %s286 = int_to_ptr.vmem [resolvable:$true] %s285
          %288 = dma.hbm_to_vmem [thread:$0]  %s284, 128, %s286, [#allocation6]
        $region24: #{tpu_custom_call.1} parent=11 // pred_fallthru
          _
        // Predicated region
        $region25: #{tpu_custom_call.1} parent=11 // pred_check
          %p289 = pneg %p159
        $region26: #{tpu_custom_call.1} parent=11 // pred_check_branch
          %291 = sbr.rel (%p289) target = $region28
        $region27: #{tpu_custom_call.1} parent=11 // pred_region
          %293 = vsyncadd [#allocation9], 0
          %s294 = smul.addr %s35, 8
          %s295 = scalar_lea.hbm %s4, %s294
          %s297 = sshll.u32 %s295, 4
          %s298 = int_to_ptr.hbm [resolvable:$true] %s297
          %s299 = sshll.u32 [#allocation8], 4
          %s300 = int_to_ptr.vmem [resolvable:$true] %s299
          %302 = dma.hbm_to_vmem [thread:$0]  %s298, 128, %s300, [#allocation9]
        $region28: #{tpu_custom_call.1} parent=11 // pred_fallthru
          _
      $region12: #{tpu_custom_call.1} parent=5 // pred_fallthru
        _
      %p303 = scmp.lt.s32.totalorder %s25, 2
      // Predicated region
      $region29: #{tpu_custom_call.1} parent=5 // pred_check
        %p304 = pneg %p303
      $region30: #{tpu_custom_call.1} parent=5 // pred_check_branch
        %306 = sbr.rel (%p304) target = $region32
      $region31: #{tpu_custom_call.1} parent=5 // pred_region
        // Predicated region
        $region33: #{tpu_custom_call.1} parent=31 // pred_check
          %p307 = pneg %p59
        $region34: #{tpu_custom_call.1} parent=31 // pred_check_branch
          %309 = sbr.rel (%p307) target = $region36
        $region35: #{tpu_custom_call.1} parent=31 // pred_region
          %s310 = sand.u32 %s49, 1
          %s311 = scalar_lea.sflag [#allocation3], %s310
          %s312 = sand.u32 %s49, 1
          %s313 = smul.addr %s312, 4
          %s314 = scalar_lea.vmem [#allocation2], %s313
          %316 = vsyncadd %s311, 0
          %s317 = sadd.s32 %s33, %s32
          %s318 = smul.addr %s317, 4
          %s319 = scalar_lea.hbm %s0, %s318
          %s321 = sshll.u32 %s319, 4
          %s322 = int_to_ptr.hbm [resolvable:$true] %s321
          %s323 = sshll.u32 %s314, 4
          %s324 = int_to_ptr.vmem [resolvable:$true] %s323
          %326 = dma.hbm_to_vmem [thread:$0]  %s322, 64, %s324, %s311
        $region36: #{tpu_custom_call.1} parent=31 // pred_fallthru
          _
      $region32: #{tpu_custom_call.1} parent=5 // pred_fallthru
        _
      %p327 = scmp.le.s32.totalorder 1, %s25
      %p328 = scmp.lt.s32.totalorder %s25, 3
      %p329 = pnand %p327, %p328
      %p330 = pneg %p329
      // Predicated region
      $region37: #{tpu_custom_call.1} parent=5 // pred_check
        _
      $region38: #{tpu_custom_call.1} parent=5 // pred_check_branch
        %332 = sbr.rel (%p329) target = $region40
      $region39: #{tpu_custom_call.1} parent=5 // pred_region
        %s333 = ssub.s32 %s25, 1
        %s334 = sand.u32 %s52, 1
        %s335 = scalar_lea.sflag [#allocation3], %s334
        %s336 = sand.u32 %s52, 1
        %s337 = smul.addr %s336, 4
        %s338 = scalar_lea.vmem [#allocation2], %s337
        // Predicated region
        $region41: #{tpu_custom_call.1} parent=39 // pred_check
          %p339 = pneg %p65
        $region42: #{tpu_custom_call.1} parent=39 // pred_check_branch
          %341 = sbr.rel (%p339) target = $region44
        $region43: #{tpu_custom_call.1} parent=39 // pred_region
          %343 = dma.done %s335, 64
        $region44: #{tpu_custom_call.1} parent=39 // pred_fallthru
          _
        // Predicated region
        $region45: #{tpu_custom_call.1} parent=39 // pred_check
          %p344 = pneg %p86
        $region46: #{tpu_custom_call.1} parent=39 // pred_check_branch
          %346 = sbr.rel (%p344) target = $region48
        $region47: #{tpu_custom_call.1} parent=39 // pred_region
          %348 = dma.done [#allocation6], 256
        $region48: #{tpu_custom_call.1} parent=39 // pred_fallthru
          _
        // Predicated region
        $region49: #{tpu_custom_call.1} parent=39 // pred_check
          %p349 = pneg %p133
        $region50: #{tpu_custom_call.1} parent=39 // pred_check_branch
          %351 = sbr.rel (%p349) target = $region52
        $region51: #{tpu_custom_call.1} parent=39 // pred_region
          %353 = dma.done [#allocation6], 128
        $region52: #{tpu_custom_call.1} parent=39 // pred_fallthru
          _
        // Predicated region
        $region53: #{tpu_custom_call.1} parent=39 // pred_check
          %p354 = pneg %p159
        $region54: #{tpu_custom_call.1} parent=39 // pred_check_branch
          %356 = sbr.rel (%p354) target = $region56
        $region55: #{tpu_custom_call.1} parent=39 // pred_region
          %358 = dma.done [#allocation9], 128
        $region56: #{tpu_custom_call.1} parent=39 // pred_fallthru
          _
        %s359 = sand.u32 %s52, 1
        %s360 = scalar_lea.sflag [#allocation3], %s359
        %s361 = sand.u32 %s52, 1
        %s362 = smul.addr %s361, 4
        %s363 = scalar_lea.vmem [#allocation2], %s362
        %p364 = pneg %p65
        %p365 = pneg %p62
        %p366 = pneg %p86
        %p367 = pneg %p83
        %p368 = pneg %p107
        %p369 = pneg %p104
        %p370 = pneg %p133
        %p371 = pneg %p130
        %p372 = pneg %p159
        %p373 = pneg %p156
        %p374 = pneg %p187
        %p375 = pneg %p184
        %s376 = sand.u32 %s174, 1
        %s377 = scalar_lea.sflag [#allocation4], %s376
        %s378 = sand.u32 %s174, 1
        %s379 = smul.addr %s378, 4
        %s380 = scalar_lea.vmem [#allocation10], %s379
        %p381 = pneg %p215
        %p382 = pneg %p212
        %s383 = sand.u32 %s30, 1
        %s384 = scalar_lea.sflag [#allocation12], %s383
        %s385 = sand.u32 %s202, 1
        %s386 = smul.addr %s385, 4
        %s387 = scalar_lea.vmem [#allocation11], %s386
        %p388 = pneg %p243
        %p389 = pneg %p240
        %s390 = sand.u32 %s30, 1
        %s391 = scalar_lea.sflag [#allocation12], %s390
        %s392 = sand.u32 %s230, 1
        %s393 = smul.addr %s392, 8
        %s394 = scalar_lea.vmem [#allocation13], %s393
        %v396 = vld [vmem:[%s338] sm:$0xf]
        %v397 = vld [vmem:[#allocation5] sm:$0xf]
        %v398 = vld [vmem:[#allocation5 + $0x4] sm:$0xf]
        %v399 = vld [vmem:[#allocation5 + $0x8] sm:$0xf]
        %v400 = vld [vmem:[#allocation5 + $0xc] sm:$0xf]
        %v401 = vld [vmem:[%s2] sm:$0x1]
        %v403 = vperm.slane %v401, 0
        %v409 = vunpack.c.l.b16 %v397
        %v410 = vunpack.c.l.b16 %v398
        %v411 = vunpack.c.l.b16 %v399
        %v412 = vunpack.c.l.b16 %v400
        %v413 = vpack.c.b16 %v410, %v409
        %v414 = vpack.c.b16 %v412, %v411
        %vm417 = vcmask 261120
        %v419 = vsel %vm417, %v396, 0
        %421 = vmatpush.bf16.msra.mxu0 0
        %422 = vmatpush.bf16.msra.mxu0 0
        %423 = vmatpush.bf16.msra.mxu0 0
        %424 = vmatpush.bf16.msra.mxu0 0
        %425 = vmatpush.bf16.msra.mxu0 0
        %426 = vmatpush.bf16.msra.mxu0 0
        %427 = vmatpush.bf16.msra.mxu0 %v414
        %428 = vmatpush.bf16.msra.mxu0 %v413
        %429 = vmatmul.bf16.gmra.mxu0 %v419
        %v430 = vpop.f32.mrf.mxu0
        %v431 = vadd.f32 %v403, %v430
        %v432 = vpop.f32.mrf.mxu0
        %433 = vdwg.mxu0
        %v434 = vld [vmem:[#allocation7] sm:$0xff]
        %v435 = vld [vmem:[#allocation8] sm:$0xff]
        %v436 = vmul.f32 %v431, %v434
        %438 = vrot.lane.b32.xlu0 %v435, 16
        %v439 = vpop.permute.xlu0 %438
        %v441 = vmul.f32 %v431, %v439
        %443 = vrot.lane.b32.xlu0 %v441, 112
        %v444 = vpop.permute.xlu0 %443
        %v446 = vadd.f32 %v436, %v444
        %448 = vrot.lane.b32.xlu0 %v434, 32
        %v449 = vpop.permute.xlu0 %448
        %v451 = vmul.f32 %v431, %v449
        %452 = vrot.lane.b32.xlu0 %v435, 48
        %v453 = vpop.permute.xlu0 %452
        %v455 = vmul.f32 %v431, %v453
        %457 = vrot.lane.b32.xlu0 %v455, 112
        %v458 = vpop.permute.xlu0 %457
        %v460 = vadd.f32 %v451, %v458
        %v461 = vpack.c.bf16 %v446, %v446
        %vm462 = vcmask 125952
        %463 = vst.msk [vmem:[%s380] sm:$0xf] %vm462, %v461
        %v464 = vpack.c.bf16 %v460, %v460
        %466 = vrot.lane.b32.xlu0 %v464, 96
        %v467 = vpop.permute.xlu0 %466
        %469 = vst.msk [vmem:[%s387] sm:$0xf] %vm462, %v467
        %471 = vrot.lane.b32.xlu0 %v431, 64
        %v472 = vpop.permute.xlu0 %471
        %vm474 = vcmask 64512
        %475 = vst.msk [vmem:[%s394] sm:$0xff] %vm474, %v472
        %s476 = sand.u32 %s174, 1
        %s477 = scalar_lea.sflag [#allocation4], %s476
        %s478 = sand.u32 %s174, 1
        %s479 = smul.addr %s478, 4
        %s480 = scalar_lea.vmem [#allocation10], %s479
        %s481 = sand.u32 %s30, 1
        %s482 = scalar_lea.sflag [#allocation12], %s481
        %s483 = sand.u32 %s202, 1
        %s484 = smul.addr %s483, 4
        %s485 = scalar_lea.vmem [#allocation11], %s484
        %s486 = sand.u32 %s30, 1
        %s487 = scalar_lea.sflag [#allocation12], %s486
        %s488 = sand.u32 %s230, 1
        %s489 = smul.addr %s488, 8
        %s490 = scalar_lea.vmem [#allocation13], %s489
        // Predicated region
        $region57: #{tpu_custom_call.1} parent=39 // pred_check
          %p491 = pneg %p184
        $region58: #{tpu_custom_call.1} parent=39 // pred_check_branch
          %493 = sbr.rel (%p491) target = $region60
        $region59: #{tpu_custom_call.1} parent=39 // pred_region
          %495 = vsyncadd %s477, 0
          %s496 = sadd.s32 %s35, %s34
          %s497 = smul.addr %s496, 4
          %s498 = scalar_lea.hbm %s5, %s497
          %s500 = sshll.u32 %s480, 4
          %s501 = int_to_ptr.vmem [resolvable:$true] %s500
          %s502 = sshll.u32 %s498, 4
          %s503 = int_to_ptr.hbm [resolvable:$true] %s502
          %505 = dma.vmem_to_hbm [thread:$0]  %s501, 64, %s503, %s477
        $region60: #{tpu_custom_call.1} parent=39 // pred_fallthru
          _
        // Predicated region
        $region61: #{tpu_custom_call.1} parent=39 // pred_check
          %p506 = pneg %p212
        $region62: #{tpu_custom_call.1} parent=39 // pred_check_branch
          %508 = sbr.rel (%p506) target = $region64
        $region63: #{tpu_custom_call.1} parent=39 // pred_region
          %510 = vsyncadd %s482, 0
          %s511 = sadd.s32 %s35, %s34
          %s512 = smul.addr %s511, 4
          %s513 = scalar_lea.hbm %s6, %s512
          %s515 = sshll.u32 %s485, 4
          %s516 = int_to_ptr.vmem [resolvable:$true] %s515
          %s517 = sshll.u32 %s513, 4
          %s518 = int_to_ptr.hbm [resolvable:$true] %s517
          %520 = dma.vmem_to_hbm [thread:$0]  %s516, 64, %s518, %s482
        $region64: #{tpu_custom_call.1} parent=39 // pred_fallthru
          _
        // Predicated region
        $region65: #{tpu_custom_call.1} parent=39 // pred_check
          %p521 = pneg %p240
        $region66: #{tpu_custom_call.1} parent=39 // pred_check_branch
          %523 = sbr.rel (%p521) target = $region68
        $region67: #{tpu_custom_call.1} parent=39 // pred_region
          %525 = vsyncadd %s487, 0
          %s526 = sadd.s32 %s35, %s34
          %s527 = smul.addr %s526, 8
          %s528 = scalar_lea.hbm %s7, %s527
          %s530 = sshll.u32 %s490, 4
          %s531 = int_to_ptr.vmem [resolvable:$true] %s530
          %s532 = sshll.u32 %s528, 4
          %s533 = int_to_ptr.hbm [resolvable:$true] %s532
          %535 = dma.vmem_to_hbm [thread:$0]  %s531, 128, %s533, %s487
        $region68: #{tpu_custom_call.1} parent=39 // pred_fallthru
          _
      $region40: #{tpu_custom_call.1} parent=5 // pred_fallthru
        _
      %p536 = scmp.le.s32.totalorder 2, %s25
      // Predicated region
      $region69: #{tpu_custom_call.1} parent=5 // pred_check
        %p537 = pneg %p536
      $region70: #{tpu_custom_call.1} parent=5 // pred_check_branch
        %539 = sbr.rel (%p537) target = $region72
      $region71: #{tpu_custom_call.1} parent=5 // pred_region
        %s540 = ssub.s32 %s25, 2
        // Predicated region
        $region73: #{tpu_custom_call.1} parent=71 // pred_check
          %p541 = pneg %p190
        $region74: #{tpu_custom_call.1} parent=71 // pred_check_branch
          %543 = sbr.rel (%p541) target = $region76
        $region75: #{tpu_custom_call.1} parent=71 // pred_region
          %s544 = sand.u32 %s175, 1
          %s545 = scalar_lea.sflag [#allocation4], %s544
          %s546 = sand.u32 %s175, 1
          %s547 = smul.addr %s546, 4
          %s548 = scalar_lea.vmem [#allocation10], %s547
          %550 = dma.done %s545, 64
        $region76: #{tpu_custom_call.1} parent=71 // pred_fallthru
          _
        // Predicated region
        $region77: #{tpu_custom_call.1} parent=71 // pred_check
          %p551 = pneg %p218
        $region78: #{tpu_custom_call.1} parent=71 // pred_check_branch
          %553 = sbr.rel (%p551) target = $region80
        $region79: #{tpu_custom_call.1} parent=71 // pred_region
          %s554 = sand.u32 %s31, 1
          %s555 = scalar_lea.sflag [#allocation12], %s554
          %s556 = sand.u32 %s203, 1
          %s557 = smul.addr %s556, 4
          %s558 = scalar_lea.vmem [#allocation11], %s557
          %560 = dma.done %s555, 64
        $region80: #{tpu_custom_call.1} parent=71 // pred_fallthru
          _
        // Predicated region
        $region81: #{tpu_custom_call.1} parent=71 // pred_check
          %p561 = pneg %p246
        $region82: #{tpu_custom_call.1} parent=71 // pred_check_branch
          %563 = sbr.rel (%p561) target = $region84
        $region83: #{tpu_custom_call.1} parent=71 // pred_region
          %s564 = sand.u32 %s31, 1
          %s565 = scalar_lea.sflag [#allocation12], %s564
          %s566 = sand.u32 %s231, 1
          %s567 = smul.addr %s566, 8
          %s568 = scalar_lea.vmem [#allocation13], %s567
          %570 = dma.done %s565, 128
        $region84: #{tpu_custom_call.1} parent=71 // pred_fallthru
          _
      $region72: #{tpu_custom_call.1} parent=5 // pred_fallthru
        _
    $region6: #{tpu_custom_call.1} parent=1 // loop_footer
      %s29 = sadd.s32 1, %s25
    $region7: #{tpu_custom_call.1} parent=1 // loop_footer_branch
      %24 = sbr.rel target = $region3
    $region8: #{tpu_custom_call.1} parent=1 // loop_exit
      _
    %571 = vsyncpa [#allocation3], 1
    %s572 = scalar_lea.sflag [#allocation3], 1
    %573 = vsyncpa %s572, 1
    %574 = vsyncpa [#allocation6], 1
    %575 = vsyncpa [#allocation9], 1
    %576 = vsyncpa [#allocation4], 1
    %s577 = scalar_lea.sflag [#allocation4], 1
    %578 = vsyncpa %s577, 1
    %579 = vsyncpa [#allocation12], 1
    %s580 = scalar_lea.sflag [#allocation12], 1
    %581 = vsyncpa %s580, 1

</llo_original>
